<compile_context>
chip_gen: v5e
topology: v5e:2x2
jax: 0.10.0
libtpu: 0.0.40
codegen_flags: <defaults>
</compile_context>

<pallas_src>
import jax
import jax.numpy as jnp
from jax.experimental import pallas as pl
from jax.experimental.pallas import tpu as pltpu


def dense_attention_kernel(x_ref, w1_ref, b1_ref, w2_ref, b2_ref,
                           w3_ref, b3_ref, o_ref):
    # Compute dtype is the (pre-cast) weight dtype; x is cast in-kernel so the
    # wrapper never burns an extra HBM pass on astype.
    wdt = w1_ref.dtype
    x = x_ref[...].astype(wdt)

    # Layer 1 + tanh: MXU matmul (f32 accumulate), f32 bias add, f32 tanh (EUP).
    h1 = jnp.tanh(
        jnp.dot(x, w1_ref[...], preferred_element_type=jnp.float32)
        + b1_ref[...]
    ).astype(wdt)

    # Layer 2 + tanh.
    h2 = jnp.tanh(
        jnp.dot(h1, w2_ref[...], preferred_element_type=jnp.float32)
        + b2_ref[...]
    ).astype(wdt)

    # Layer 3 (out_features == 1): natural MXU orientation (tm, h2) @ (h2, 1).
    out = jnp.dot(h2, w3_ref[...], preferred_element_type=jnp.float32) + b3_ref[...]
    o_ref[...] = out.astype(o_ref.dtype)


def _round_up(a, b):
    return ((a + b - 1) // b) * b


def dense_attention_pallas(x, params, *, tm=4096, compute_dtype=jnp.bfloat16,
                           min_grid=4):
    """x: (..., input_dim). Returns (..., 1), matching the PyTorch module."""
    w1, b1, w2, b2, w3, b3 = params
    lead_shape = x.shape[:-1]
    d_in = x.shape[-1]
    h1_dim = w1.shape[1]
    h2_dim = w2.shape[1]
    out_dtype = x.dtype

    # Metadata-only reshape (contiguous leading dims) -> no HBM pass.
    x2d = x.reshape(-1, d_in)
    m = x2d.shape[0]

    # Tile selection (no padding; Pallas handles the ragged last block):
    #  - tiny inputs: a single 8-aligned tile.
    #  - everything else: cap the tile so we get >= min_grid grid steps
    #    (keeps both v7x TensorCores busy and enables DMA/compute overlap),
    #    never exceeding the requested tm.
    if m <= 8 * min_grid:
        tm_eff = _round_up(max(m, 1), 8)
    else:
        tm_eff = min(_round_up(tm, 8), _round_up(pl.cdiv(m, min_grid), 8))
    grid = (pl.cdiv(m, tm_eff),)

    cdt = jnp.dtype(compute_dtype) if compute_dtype is not None else jnp.float32

    # Weights are tiny (KBs): casting/reshaping them outside is negligible.
    w1c = w1.astype(cdt)
    w2c = w2.astype(cdt)
    w3c = w3.reshape(h2_dim, 1).astype(cdt)
    b1r = b1.reshape(1, h1_dim).astype(jnp.float32)
    b2r = b2.reshape(1, h2_dim).astype(jnp.float32)
    b3r = b3.reshape(1, 1).astype(jnp.float32)

    out = pl.pallas_call(
        dense_attention_kernel,
        out_shape=jax.ShapeDtypeStruct((m, 1), out_dtype),
        grid_spec=pltpu.PrefetchScalarGridSpec(
            num_scalar_prefetch=0,
            grid=grid,
            in_specs=[
                pl.BlockSpec((tm_eff, d_in), lambda i: (i, 0)),    # x tile
                pl.BlockSpec((d_in, h1_dim), lambda i: (0, 0)),    # W1 (resident)
                pl.BlockSpec((1, h1_dim), lambda i: (0, 0)),       # b1
                pl.BlockSpec((h1_dim, h2_dim), lambda i: (0, 0)),  # W2 (resident)
                pl.BlockSpec((1, h2_dim), lambda i: (0, 0)),       # b2
                pl.BlockSpec((h2_dim, 1), lambda i: (0, 0)),       # w3 column
                pl.BlockSpec((1, 1), lambda i: (0, 0)),            # b3
            ],
            out_specs=pl.BlockSpec((tm_eff, 1), lambda i: (i, 0)),
        ),
        compiler_params=pltpu.CompilerParams(
            dimension_semantics=("parallel",),
            vmem_limit_bytes=32 * 1024 * 1024,
        ),
    )(x2d, w1c, b1r, w2c, b2r, w3c, b3r)

    return out.reshape(*lead_shape, 1)


def init_params(key, input_dim, hidden_dim1, hidden_dim2):
    """PyTorch-style uniform(+-1/sqrt(fan_in)) init; weights stored (in, out)."""
    ks = jax.random.split(key, 6)

    def lin(kw, kb, fan_in, fan_out):
        bound = 1.0 / jnp.sqrt(jnp.float32(fan_in))
        w = jax.random.uniform(kw, (fan_in, fan_out), jnp.float32, -bound, bound)
        b = jax.random.uniform(kb, (fan_out,), jnp.float32, -bound, bound)
        return w, b

    w1, b1 = lin(ks[0], ks[1], input_dim, hidden_dim1)
    w2, b2 = lin(ks[2], ks[3], hidden_dim1, hidden_dim2)
    w3, b3 = lin(ks[4], ks[5], hidden_dim2, 1)
    return (w1, b1, w2, b2, w3, b3)


def dense_attention_ref(x, params):
    w1, b1, w2, b2, w3, b3 = params
    h = jnp.tanh(x @ w1 + b1)
    h = jnp.tanh(h @ w2 + b2)
    return h @ w3.reshape(-1, 1) + b3


if __name__ == "__main__":
    key = jax.random.PRNGKey(0)
    k_x, k_p, k_x2 = jax.random.split(key, 3)

    batch, seq, input_dim = 2, 8, 32
    hidden_dim1, hidden_dim2 = 64, 32

    params = init_params(k_p, input_dim, hidden_dim1, hidden_dim2)

    # Small, module-consistent shape (single-tile path).
    x = jax.random.normal(k_x, (batch, seq, input_dim), dtype=jnp.float32)
    ref = dense_attention_ref(x, params)

    # Strict check of forward semantics with f32 compute.
    out_f32 = jax.block_until_ready(
        dense_attention_pallas(x, params, compute_dtype=jnp.float32))
    assert out_f32.shape == (batch, seq, 1), out_f32.shape
    assert jnp.allclose(out_f32, ref, atol=2e-5, rtol=2e-5), \
        float(jnp.max(jnp.abs(out_f32 - ref)))

    # Default bf16-input / f32-accumulate path: looser tolerance.
    out_bf16 = jax.block_until_ready(dense_attention_pallas(x, params))
    assert out_bf16.shape == (batch, seq, 1), out_bf16.shape
    assert jnp.allclose(out_bf16, ref, atol=5e-2, rtol=5e-2), \
        float(jnp.max(jnp.abs(out_bf16 - ref)))

    # Multi-tile path: grid > 1, ragged last block (no wrapper padding).
    x2 = jax.random.normal(k_x2, (4, 500, input_dim), dtype=jnp.float32)
    ref2 = dense_attention_ref(x2, params)
    out2 = jax.block_until_ready(
        dense_attention_pallas(x2, params, compute_dtype=jnp.float32, tm=512))
    assert out2.shape == (4, 500, 1), out2.shape
    assert jnp.allclose(out2, ref2, atol=2e-5, rtol=2e-5), \
        float(jnp.max(jnp.abs(out2 - ref2)))

    print("KERNEL_OK")
</pallas_src>

<mosaic_0001>
module attributes {stable_mosaic.version = 11 : i64} {
  func.func @dense_attention_kernel(%arg0: i32, %arg1: memref<16x32xf32, #tpu.memory_space<vmem>>, %arg2: memref<32x64xf32, #tpu.memory_space<vmem>>, %arg3: memref<1x64xf32, #tpu.memory_space<vmem>>, %arg4: memref<64x32xf32, #tpu.memory_space<vmem>>, %arg5: memref<1x32xf32, #tpu.memory_space<vmem>>, %arg6: memref<32x1xf32, #tpu.memory_space<vmem>>, %arg7: memref<1x1xf32, #tpu.memory_space<vmem>>, %arg8: memref<16x1xf32, #tpu.memory_space<vmem>>) attributes {dimension_semantics = [#tpu.dimension_semantics<parallel>], iteration_bounds = array<i64: 1>, scalar_prefetch = 0 : i64, scratch_operands = 0 : i64, tpu.core_type = #tpu.core_type<tc>, window_params = [{transform_indices = @transform_0, window_bounds = array<i64: 16, 32>}, {pipeline_mode = #tpu.pipeline_mode<synchronous>, transform_indices = @transform_1, window_bounds = array<i64: 32, 64>}, {pipeline_mode = #tpu.pipeline_mode<synchronous>, transform_indices = @transform_2, window_bounds = array<i64: 1, 64>}, {pipeline_mode = #tpu.pipeline_mode<synchronous>, transform_indices = @transform_3, window_bounds = array<i64: 64, 32>}, {pipeline_mode = #tpu.pipeline_mode<synchronous>, transform_indices = @transform_4, window_bounds = array<i64: 1, 32>}, {pipeline_mode = #tpu.pipeline_mode<synchronous>, transform_indices = @transform_5, window_bounds = array<i64: 32, 1>}, {pipeline_mode = #tpu.pipeline_mode<synchronous>, transform_indices = @transform_6, window_bounds = array<i64: 1, 1>}, {transform_indices = @transform_7, window_bounds = array<i64: 16, 1>}]} {
    %c0 = arith.constant 0 : index
    %c0_0 = arith.constant 0 : index
    %0 = vector.load %arg1[%c0, %c0_0] : memref<16x32xf32, #tpu.memory_space<vmem>>, vector<16x32xf32>
    %c0_1 = arith.constant 0 : index
    %c0_2 = arith.constant 0 : index
    %1 = vector.load %arg2[%c0_1, %c0_2] : memref<32x64xf32, #tpu.memory_space<vmem>>, vector<32x64xf32>
    %cst = arith.constant dense<0.000000e+00> : vector<16x64xf32>
    %2 = tpu.matmul %0, %1, %cst {dimension_numbers = #tpu.dot_dimension_numbers<[1], [0], [0], [1], [0, 0, 1, 1], [], []>} : vector<16x32xf32>, vector<32x64xf32>, vector<16x64xf32> -> vector<16x64xf32>
    %c0_3 = arith.constant 0 : index
    %c0_4 = arith.constant 0 : index
    %3 = vector.load %arg3[%c0_3, %c0_4] : memref<1x64xf32, #tpu.memory_space<vmem>>, vector<1x64xf32>
    %4 = vector.broadcast %3 : vector<1x64xf32> to vector<16x64xf32>
    %5 = arith.addf %2, %4 : vector<16x64xf32>
    %6 = math.tanh %5 : vector<16x64xf32>
    %c0_5 = arith.constant 0 : index
    %c0_6 = arith.constant 0 : index
    %7 = vector.load %arg4[%c0_5, %c0_6] : memref<64x32xf32, #tpu.memory_space<vmem>>, vector<64x32xf32>
    %cst_7 = arith.constant dense<0.000000e+00> : vector<16x32xf32>
    %8 = tpu.matmul %6, %7, %cst_7 {dimension_numbers = #tpu.dot_dimension_numbers<[1], [0], [0], [1], [0, 0, 1, 1], [], []>} : vector<16x64xf32>, vector<64x32xf32>, vector<16x32xf32> -> vector<16x32xf32>
    %c0_8 = arith.constant 0 : index
    %c0_9 = arith.constant 0 : index
    %9 = vector.load %arg5[%c0_8, %c0_9] : memref<1x32xf32, #tpu.memory_space<vmem>>, vector<1x32xf32>
    %10 = vector.broadcast %9 : vector<1x32xf32> to vector<16x32xf32>
    %11 = arith.addf %8, %10 : vector<16x32xf32>
    %12 = math.tanh %11 : vector<16x32xf32>
    %c0_10 = arith.constant 0 : index
    %c0_11 = arith.constant 0 : index
    %13 = vector.load %arg6[%c0_10, %c0_11] : memref<32x1xf32, #tpu.memory_space<vmem>>, vector<32x1xf32>
    %cst_12 = arith.constant dense<0.000000e+00> : vector<16x1xf32>
    %14 = tpu.matmul %12, %13, %cst_12 {dimension_numbers = #tpu.dot_dimension_numbers<[1], [0], [0], [1], [0, 0, 1, 1], [], []>} : vector<16x32xf32>, vector<32x1xf32>, vector<16x1xf32> -> vector<16x1xf32>
    %c0_13 = arith.constant 0 : index
    %c0_14 = arith.constant 0 : index
    %15 = vector.load %arg7[%c0_13, %c0_14] : memref<1x1xf32, #tpu.memory_space<vmem>>, vector<1x1xf32>
    %16 = vector.broadcast %15 : vector<1x1xf32> to vector<16x1xf32>
    %17 = arith.addf %14, %16 : vector<16x1xf32>
    %c0_15 = arith.constant 0 : index
    %c0_16 = arith.constant 0 : index
    %18 = vector.load %arg8[%c0_15, %c0_16] : memref<16x1xf32, #tpu.memory_space<vmem>>, vector<16x1xf32>
    tpu.vector_store %arg8[%c0_15, %c0_16], %17 {strides = array<i32>} : memref<16x1xf32, #tpu.memory_space<vmem>>, vector<16x1xf32>,
    return
  }
  func.func @transform_0(%arg0: i32) -> (i32, i32) {
    %c0_i32 = arith.constant 0 : i32
    %c0_i32_0 = arith.constant 0 : i32
    return %arg0, %c0_i32 : i32, i32
  }
  func.func @transform_1(%arg0: i32) -> (i32, i32) {
    %c0_i32 = arith.constant 0 : i32
    %c0_i32_0 = arith.constant 0 : i32
    %c0_i32_1 = arith.constant 0 : i32
    return %c0_i32, %c0_i32_0 : i32, i32
  }
  func.func @transform_2(%arg0: i32) -> (i32, i32) {
    %c0_i32 = arith.constant 0 : i32
    %c0_i32_0 = arith.constant 0 : i32
    %c0_i32_1 = arith.constant 0 : i32
    return %c0_i32, %c0_i32_0 : i32, i32
  }
  func.func @transform_3(%arg0: i32) -> (i32, i32) {
    %c0_i32 = arith.constant 0 : i32
    %c0_i32_0 = arith.constant 0 : i32
    %c0_i32_1 = arith.constant 0 : i32
    return %c0_i32, %c0_i32_0 : i32, i32
  }
  func.func @transform_4(%arg0: i32) -> (i32, i32) {
    %c0_i32 = arith.constant 0 : i32
    %c0_i32_0 = arith.constant 0 : i32
    %c0_i32_1 = arith.constant 0 : i32
    return %c0_i32, %c0_i32_0 : i32, i32
  }
  func.func @transform_5(%arg0: i32) -> (i32, i32) {
    %c0_i32 = arith.constant 0 : i32
    %c0_i32_0 = arith.constant 0 : i32
    %c0_i32_1 = arith.constant 0 : i32
    return %c0_i32, %c0_i32_0 : i32, i32
  }
  func.func @transform_6(%arg0: i32) -> (i32, i32) {
    %c0_i32 = arith.constant 0 : i32
    %c0_i32_0 = arith.constant 0 : i32
    %c0_i32_1 = arith.constant 0 : i32
    return %c0_i32, %c0_i32_0 : i32, i32
  }
  func.func @transform_7(%arg0: i32) -> (i32, i32) {
    %c0_i32 = arith.constant 0 : i32
    %c0_i32_0 = arith.constant 0 : i32
    return %arg0, %c0_i32 : i32, i32
  }
}

</mosaic_0001>

<llo_original>
// kernel: tpu_custom_call.1
$region0: #{tpu_custom_call.1}
  #allocation0 [shape = 'u32[]', space=smem, size = 0x4, offset = 0x4, fixed_abs, tag = 'smem constant byte address 0x4 - core index']
  #allocation1 [shape = 'u32[72,128]{1,0:T(1,128)}', space=vmem, size = 0x9000, scoped, tag = 'internal scratch']
  #allocation2 [shape = 'f32[1,1]{1,0:T(1,128)S(1)}', space=vmem, size = 0x200, scoped, tag = 'scoped memory for tpu_custom_call.1']
  %s0 = inlined_call_operand.vmem [shape: f32[16,32], index: 0, kind: input, shape index: {}]
  %s1 = inlined_call_operand.vmem [shape: f32[32,64], index: 1, kind: input, shape index: {}]
  %s2 = inlined_call_operand.vmem [shape: f32[1,64], index: 2, kind: input, shape index: {}]
  %s3 = inlined_call_operand.vmem [shape: f32[64,32], index: 3, kind: input, shape index: {}]
  %s4 = inlined_call_operand.vmem [shape: f32[1,32], index: 4, kind: input, shape index: {}]
  %s5 = inlined_call_operand.vmem [shape: f32[32,1], index: 5, kind: input, shape index: {}]
  %s6 = inlined_call_operand.<no memory space> [shape: f32[1,1], index: 6, kind: input, shape index: {}]
  %s7 = inlined_call_operand.vmem [shape: f32[16,1], index: 7, kind: output, shape index: {}]
  %s8 = sld [smem:[#allocation0]]
  $region38: #{tpu_custom_call.1} parent=0
    _
  %s10 = ssub.s32 1, %s8
  %s11 = scalar_select 0, %s10, %s8
  %v12 = vstv %s6
  %13 = vst [vmem:[#allocation2] sm:$0x1] %v12
  // Predicated region
  $region2: #{tpu_custom_call.1} parent=0 // pred_check
    _
  $region3: #{tpu_custom_call.1} parent=0 // pred_check_branch
    %15 = sbr.rel (0) target = $region5
  $region4: #{tpu_custom_call.1} parent=0 // pred_region
    _
  $region5: #{tpu_custom_call.1} parent=0 // pred_fallthru
    _
  // Predicated region
  $region6: #{tpu_custom_call.1} parent=0 // pred_check
    _
  $region7: #{tpu_custom_call.1} parent=0 // pred_check_branch
    %17 = sbr.rel (0) target = $region9
  $region8: #{tpu_custom_call.1} parent=0 // pred_region
    _
  $region9: #{tpu_custom_call.1} parent=0 // pred_fallthru
    _
  // Predicated region
  $region10: #{tpu_custom_call.1} parent=0 // pred_check
    _
  $region11: #{tpu_custom_call.1} parent=0 // pred_check_branch
    %19 = sbr.rel (0) target = $region13
  $region12: #{tpu_custom_call.1} parent=0 // pred_region
    _
  $region13: #{tpu_custom_call.1} parent=0 // pred_fallthru
    _
  // Predicated region
  $region14: #{tpu_custom_call.1} parent=0 // pred_check
    _
  $region15: #{tpu_custom_call.1} parent=0 // pred_check_branch
    %21 = sbr.rel (0) target = $region17
  $region16: #{tpu_custom_call.1} parent=0 // pred_region
    _
  $region17: #{tpu_custom_call.1} parent=0 // pred_fallthru
    _
  // Predicated region
  $region18: #{tpu_custom_call.1} parent=0 // pred_check
    _
  $region19: #{tpu_custom_call.1} parent=0 // pred_check_branch
    %23 = sbr.rel (0) target = $region21
  $region20: #{tpu_custom_call.1} parent=0 // pred_region
    _
  $region21: #{tpu_custom_call.1} parent=0 // pred_fallthru
    _
  // Predicated region
  $region22: #{tpu_custom_call.1} parent=0 // pred_check
    _
  $region23: #{tpu_custom_call.1} parent=0 // pred_check_branch
    %25 = sbr.rel (0) target = $region25
  $region24: #{tpu_custom_call.1} parent=0 // pred_region
    _
  $region25: #{tpu_custom_call.1} parent=0 // pred_fallthru
    _
  // Predicated region
  $region26: #{tpu_custom_call.1} parent=0 // pred_check
    _
  $region27: #{tpu_custom_call.1} parent=0 // pred_check_branch
    %27 = sbr.rel (0) target = $region29
  $region28: #{tpu_custom_call.1} parent=0 // pred_region
    _
  $region29: #{tpu_custom_call.1} parent=0 // pred_fallthru
    _
  %v28 = vld [vmem:[%s0] sm:$0xff]
  %v29 = vld [vmem:[%s0 + $0x8] sm:$0xff]
  %v30 = vld [vmem:[%s1] sm:$0xff]
  %v31 = vld [vmem:[%s1 + $0x8] sm:$0xff]
  %v32 = vld [vmem:[%s1 + $0x10] sm:$0xff]
  %v33 = vld [vmem:[%s1 + $0x18] sm:$0xff]
  %v34 = vld [vmem:[%s2] sm:$0x1]
  %v36 = vperm.slane %v34, 0
  %vm38 = vcmask 261120
  %v40 = vsel %vm38, %v28, 0
  %v43 = vsel %vm38, %v29, 0
  %45 = vmatpush.msra.mxu0 0.0
  %46 = vmatpush.msra.mxu0 0.0
  %47 = vmatpush.msra.mxu0 0.0
  %48 = vmatpush.msra.mxu0 0.0
  %49 = vmatpush.msra.mxu0 0.0
  %50 = vmatpush.msra.mxu0 0.0
  %51 = vmatpush.msra.mxu0 0.0
  %52 = vmatpush.msra.mxu0 0.0
  %53 = vmatpush.msra.mxu0 0.0
  %54 = vmatpush.msra.mxu0 0.0
  %55 = vmatpush.msra.mxu0 0.0
  %56 = vmatpush.msra.mxu0 0.0
  %57 = vmatpush.msra.mxu0 %v33
  %58 = vmatpush.msra.mxu0 %v32
  %59 = vmatpush.msra.mxu0 %v31
  %60 = vmatpush.msra.mxu0 %v30
  %61 = vmatmul.f32.gmra.mxu0 %v40
  %v62 = vpop.f32.mrf.mxu0
  %v63 = vadd.f32 %v36, %v62
  %64 = vmatmul.f32.gmra.mxu0 %v43
  %v65 = vpop.f32.mrf.mxu0
  %v66 = vadd.f32 %v36, %v65
  %67 = vdwg.mxu0
  %v68 = vtanh.pop %v63
  %v69 = vtanh.pop %v66
  %v70 = vld [vmem:[%s3] sm:$0xff]
  %v71 = vld [vmem:[%s3 + $0x8] sm:$0xff]
  %v72 = vld [vmem:[%s3 + $0x10] sm:$0xff]
  %v73 = vld [vmem:[%s3 + $0x18] sm:$0xff]
  %v74 = vld [vmem:[%s3 + $0x20] sm:$0xff]
  %v75 = vld [vmem:[%s3 + $0x28] sm:$0xff]
  %v76 = vld [vmem:[%s3 + $0x30] sm:$0xff]
  %v77 = vld [vmem:[%s3 + $0x38] sm:$0xff]
  %v78 = vld [vmem:[%s4] sm:$0x1]
  %v80 = vperm.slane %v78, 0
  %vm82 = vcmask 523264
  %v84 = vsel %vm82, %v68, 0
  %v87 = vsel %vm82, %v69, 0
  %89 = vmatpush.msra.mxu0 0.0
  %90 = vmatpush.msra.mxu0 0.0
  %91 = vmatpush.msra.mxu0 0.0
  %92 = vmatpush.msra.mxu0 0.0
  %93 = vmatpush.msra.mxu0 0.0
  %94 = vmatpush.msra.mxu0 0.0
  %95 = vmatpush.msra.mxu0 0.0
  %96 = vmatpush.msra.mxu0 0.0
  %97 = vmatpush.msra.mxu0 %v77
  %98 = vmatpush.msra.mxu0 %v76
  %99 = vmatpush.msra.mxu0 %v75
  %100 = vmatpush.msra.mxu0 %v74
  %101 = vmatpush.msra.mxu0 %v73
  %102 = vmatpush.msra.mxu0 %v72
  %103 = vmatpush.msra.mxu0 %v71
  %104 = vmatpush.msra.mxu0 %v70
  %105 = vmatmul.f32.gmra.mxu0 %v84
  %v106 = vpop.f32.mrf.mxu0
  %v107 = vadd.f32 %v80, %v106
  %108 = vmatmul.f32.gmra.mxu0 %v87
  %v109 = vpop.f32.mrf.mxu0
  %v110 = vadd.f32 %v80, %v109
  %111 = vdwg.mxu0
  %v112 = vtanh.pop %v107
  %v113 = vtanh.pop %v110
  %v114 = vld [vmem:[%s5] sm:$0xff]
  %v115 = vld [vmem:[%s5 + $0x8] sm:$0xff]
  %v116 = vld [vmem:[%s5 + $0x10] sm:$0xff]
  %v117 = vld [vmem:[%s5 + $0x18] sm:$0xff]
  %v118 = vld [vmem:[#allocation2] sm:$0x1]
  %v120 = vperm.slane %v118, 0
  %v123 = vsel %vm38, %v112, 0
  %v126 = vsel %vm38, %v113, 0
  %128 = vmatpush.msra.mxu0 0.0
  %129 = vmatpush.msra.mxu0 0.0
  %130 = vmatpush.msra.mxu0 0.0
  %131 = vmatpush.msra.mxu0 0.0
  %132 = vmatpush.msra.mxu0 0.0
  %133 = vmatpush.msra.mxu0 0.0
  %134 = vmatpush.msra.mxu0 0.0
  %135 = vmatpush.msra.mxu0 0.0
  %136 = vmatpush.msra.mxu0 0.0
  %137 = vmatpush.msra.mxu0 0.0
  %138 = vmatpush.msra.mxu0 0.0
  %139 = vmatpush.msra.mxu0 0.0
  %140 = vmatpush.msra.mxu0 %v117
  %141 = vmatpush.msra.mxu0 %v116
  %142 = vmatpush.msra.mxu0 %v115
  %143 = vmatpush.msra.mxu0 %v114
  %144 = vmatmul.f32.gmra.mxu0 %v123
  %v145 = vpop.f32.mrf.mxu0
  %v146 = vadd.f32 %v120, %v145
  %147 = vmatmul.f32.gmra.mxu0 %v126
  %v148 = vpop.f32.mrf.mxu0
  %v149 = vadd.f32 %v120, %v148
  %150 = vdwg.mxu0
  %vm151 = vcmask 7168
  %152 = vst.msk [vmem:[%s7] sm:$0xff] %vm151, %v146
  %153 = vst.msk [vmem:[%s7 + $0x8] sm:$0xff] %vm151, %v149
  // Predicated region
  $region30: #{tpu_custom_call.1} parent=0 // pred_check
    _
  $region31: #{tpu_custom_call.1} parent=0 // pred_check_branch
    %155 = sbr.rel (0) target = $region33
  $region32: #{tpu_custom_call.1} parent=0 // pred_region
    _
  $region33: #{tpu_custom_call.1} parent=0 // pred_fallthru
    _
  // Predicated region
  $region34: #{tpu_custom_call.1} parent=0 // pred_check
    _
  $region35: #{tpu_custom_call.1} parent=0 // pred_check_branch
    %157 = sbr.rel (0) target = $region37
  $region36: #{tpu_custom_call.1} parent=0 // pred_region
    _
  $region37: #{tpu_custom_call.1} parent=0 // pred_fallthru
    _

</llo_original>
